<compile_context>
chip_gen: v7x
topology: tpu7x:2x2x1
jax: 0.10.0
libtpu: 0.0.40
codegen_flags: <defaults>
</compile_context>

<pallas_src>
import functools

import jax
import jax.numpy as jnp
from jax.experimental import pallas as pl
from jax.experimental.pallas import tpu as pltpu

IGNORE_INDEX = -100


def _round_up(x, m):
    return ((x + m - 1) // m) * m


def _vmem_capacity_bytes():
    """Physical VMEM per TensorCore; conservative 64 MiB (v7x) fallback."""
    try:
        info = pltpu.get_tpu_info()
        for attr in ("vmem_capacity_bytes", "vmem_size_bytes", "vmem_bytes"):
            v = getattr(info, attr, None)
            if v:
                return int(v)
    except Exception:
        pass
    try:
        kind = jax.devices()[0].device_kind.lower()
        if "v7" not in kind and "7x" not in kind:
            return 128 * 1024 * 1024
    except Exception:
        pass
    return 64 * 1024 * 1024


def _num_tensorcores():
    """TensorCores visible to one pallas_call (dual-TC on v4/v5p/v7x)."""
    try:
        kind = jax.devices()[0].device_kind.lower()
    except Exception:
        return 1
    if "v7" in kind or "7x" in kind or "v4" in kind or "v5p" in kind:
        return 2
    return 1


def _bbfl_tile_kernel(logits_ref, targets_ref, counts_ref, fsum_ref, *,
                      n_tokens, tile_m, steps_per_core, gamma):
    core = pl.program_id(0)
    step = pl.program_id(1)

    # Resident per-core output blocks double as accumulators (P3 pattern).
    @pl.when(step == 0)
    def _init():
        counts_ref[...] = jnp.zeros_like(counts_ref)
        fsum_ref[...] = jnp.zeros_like(fsum_ref)

    logits = logits_ref[...].astype(jnp.float32)           # [TM, C]
    tgt = targets_ref[...]                                  # [TM, 1] int32
    tm, c = logits.shape

    # True (un-clamped) global tile index; the block index_map clamps the DMA
    # source, but masking here keeps duplicate / padded rows out of the sums.
    g = core * steps_per_core + step
    row_ids = jax.lax.broadcasted_iota(jnp.int32, (tm, 1), 0) + g * tile_m
    valid = (tgt != IGNORE_INDEX) & (row_ids < n_tokens)    # [TM, 1]
    tgt_safe = jnp.where(valid, tgt, -1)                    # [TM, 1]
    class_ids = jax.lax.broadcasted_iota(jnp.int32, (1, c), 1)
    one_hot = class_ids == tgt_safe                         # [TM, C] (bcast)
    sel = jnp.where(one_hot, 1.0, 0.0)                      # [TM, C] f32

    # cross entropy = logsumexp(logits) - logit_target (fused gather).
    row_max = jnp.max(logits, axis=-1, keepdims=True)
    shifted = logits - row_max
    sum_exp = jnp.sum(jnp.exp(shifted), axis=-1, keepdims=True)
    shifted_t = jnp.sum(sel * shifted, axis=-1, keepdims=True)
    ce = jnp.log(sum_exp) - shifted_t                       # [TM, 1]

    # focal modulation (alpha=None): (1 - p_t)^gamma * ce
    pt = jnp.exp(-ce)
    omp = 1.0 - pt
    if gamma == 2.0:                 # common default: two VPU muls
        mod = omp * omp
    elif gamma == 1.0:
        mod = omp
    elif gamma == 0.0:
        mod = jnp.ones_like(omp)
    else:
        mod = jnp.power(jnp.maximum(omp, 0.0), gamma)
    # Zero masked rows on the narrow [TM,1] column before any broadcasted
    # multiply so NaN/Inf garbage in padded tail rows can never leak.
    focal = jnp.where(valid, mod * ce, 0.0)                 # [TM, 1]

    counts_ref[...] += jnp.sum(sel, axis=0, keepdims=True)          # (1,1,C)
    fsum_ref[...] += jnp.sum(sel * focal, axis=0, keepdims=True)    # (1,1,C)


def batch_balanced_focal_loss(logits, targets, *, num_labels, gamma=2.0,
                              beta=0.999, tile_rows=None, num_cores=None):
    """Forward of BatchBalancedFocalLoss (reduction='mean', base_alpha=None).

    logits : [B, S, num_labels] (or [N, num_labels]) float32 / bfloat16
    targets: [B, S] (or [N]) integer labels, ignore_index = -100
    """
    c = logits.shape[-1]
    assert c == num_labels
    logits2d = logits.reshape(-1, c)
    tgt2d = targets.reshape(-1, 1).astype(jnp.int32)
    n = logits2d.shape[0]

    itemsize = jnp.dtype(logits2d.dtype).itemsize
    # Sublane granularity: 8 for 32-bit inputs, 16 for bf16/fp16 inputs.
    sub = 8 if itemsize >= 4 else 16

    # Scoped-VMEM limit sized per generation (v5e/v6e: ~96 MiB of 128 MiB,
    # v7x: ~48 MiB of 64 MiB).
    vmem_cap = _vmem_capacity_bytes()
    vmem_limit = min((vmem_cap * 3) // 4, 100 * 1024 * 1024)

    if tile_rows is None:
        # Byte-budget-based row tile.  VMEM cost per row ~= lane-padded C *
        # (2x double-buffered input + ~4 full-tile f32 temporaries: f32 cast,
        # shifted, exp(shifted), sel).
        c_pad = _round_up(c, 128)
        bytes_per_row = c_pad * (2 * itemsize + 4 * 4)
        budget = vmem_limit // 2
        tile = max(sub, ((budget // bytes_per_row) // sub) * sub)
    else:
        tile = max(sub, _round_up(int(tile_rows), sub))
    tile = min(tile, _round_up(n, sub))

    total_tiles = pl.cdiv(n, tile)
    ncores = num_cores if num_cores is not None else _num_tensorcores()
    ncores = max(1, min(int(ncores), total_tiles))
    spc = pl.cdiv(total_tiles, ncores)          # grid steps per core

    kernel = functools.partial(_bbfl_tile_kernel, n_tokens=n, tile_m=tile,
                               steps_per_core=spc, gamma=float(gamma))

    def in_map(core, step):
        # Clamp so a core's overhang step never DMAs past the array; the
        # kernel masks those rows out via the un-clamped tile index.
        return (jnp.minimum(core * spc + step, total_tiles - 1), 0)

    counts3, fsum3 = pl.pallas_call(
        kernel,
        grid=(ncores, spc),
        in_specs=[
            pl.BlockSpec((tile, c), in_map),
            pl.BlockSpec((tile, 1), in_map),
        ],
        out_specs=[
            pl.BlockSpec((1, 1, c), lambda core, step: (core, 0, 0)),
            pl.BlockSpec((1, 1, c), lambda core, step: (core, 0, 0)),
        ],
        out_shape=[
            jax.ShapeDtypeStruct((ncores, 1, c), jnp.float32),
            jax.ShapeDtypeStruct((ncores, 1, c), jnp.float32),
        ],
        compiler_params=pltpu.CompilerParams(
            dimension_semantics=("parallel", "arbitrary"),
            vmem_limit_bytes=int(vmem_limit)),
    )(logits2d, tgt2d)

    # Tiny O(num_labels) epilogue: sum per-core partials, effective-number
    # batch re-weighting, weighted mean over valid tokens.
    counts = jnp.sum(counts3[:, 0, :], axis=0)              # [C]
    fsum = jnp.sum(fsum3[:, 0, :], axis=0)                  # [C]
    n_valid = jnp.sum(counts)
    # NOTE: zero-count classes get weight (1-beta)/1e-8 by design (matches
    # the reference); they dominate the normalization on purpose.
    eff_num = 1.0 - jnp.power(jnp.float32(beta), counts)
    weights = (1.0 - beta) / (eff_num + 1e-8)
    weights = weights / jnp.sum(weights) * float(num_labels)
    loss_sum = jnp.sum(weights * fsum)
    # PyTorch returns 0.0 when every token is ignore_index.
    return jnp.where(n_valid > 0, loss_sum / jnp.maximum(n_valid, 1.0), 0.0)


def _reference(logits, targets, *, num_labels, gamma=2.0, beta=0.999):
    """Pure-JAX reference mirroring the PyTorch module (sanity check)."""
    c = logits.shape[-1]
    x = logits.reshape(-1, c).astype(jnp.float32)
    t = targets.reshape(-1)
    valid = t != IGNORE_INDEX
    t_safe = jnp.where(valid, t, 0)
    logp = jax.nn.log_softmax(x, axis=-1)
    ce = -jnp.take_along_axis(logp, t_safe[:, None], axis=-1)[:, 0]
    pt = jnp.exp(-ce)
    focal = (1.0 - pt) ** gamma * ce
    counts = jnp.sum(jax.nn.one_hot(t_safe, c)
                     * valid[:, None].astype(jnp.float32), axis=0)
    eff = 1.0 - beta ** counts
    w = (1.0 - beta) / (eff + 1e-8)
    w = w / jnp.sum(w) * num_labels
    sw = w[t_safe]
    vf = valid.astype(jnp.float32)
    return jnp.sum(focal * sw * vf) / jnp.sum(vf)


if __name__ == "__main__":
    key = jax.random.PRNGKey(0)
    B, S, C = 2, 8, 9   # batch, seq_len, num_labels (NER-style)
    k1, k2, k3 = jax.random.split(key, 3)
    logits = jax.random.normal(k1, (B, S, C), dtype=jnp.float32)
    targets = jax.random.randint(k2, (B, S), 0, C, dtype=jnp.int32)
    # sprinkle some ignore_index tokens (padding / subword continuations)
    ignore_mask = jax.random.bernoulli(k3, 0.2, (B, S))
    targets = jnp.where(ignore_mask, IGNORE_INDEX, targets)

    ref = _reference(logits, targets, num_labels=C, gamma=2.0, beta=0.999)

    # 1) small tile -> multi-step accumulation path
    loss = batch_balanced_focal_loss(logits, targets, num_labels=C,
                                     gamma=2.0, beta=0.999, tile_rows=8)
    loss = jax.block_until_ready(loss)
    assert jnp.allclose(loss, ref, rtol=1e-3, atol=1e-6), (loss, ref)

    # 2) auto (byte-budget) tile path
    loss2 = jax.block_until_ready(
        batch_balanced_focal_loss(logits, targets, num_labels=C))
    assert jnp.allclose(loss2, ref, rtol=1e-3, atol=1e-6), (loss2, ref)

    # 3) explicit 2-core grid (exercises the per-core output rows + epilogue
    #    sum even on single-TC chips, where it just runs serially)
    loss3 = jax.block_until_ready(
        batch_balanced_focal_loss(logits, targets, num_labels=C,
                                  tile_rows=8, num_cores=2))
    assert jnp.allclose(loss3, ref, rtol=1e-3, atol=1e-6), (loss3, ref)

    # 4) partial last tile (tail-row masking)
    logits_p, targets_p = logits[:, :7], targets[:, :7]
    ref_p = _reference(logits_p, targets_p, num_labels=C)
    loss_p = jax.block_until_ready(
        batch_balanced_focal_loss(logits_p, targets_p, num_labels=C,
                                  tile_rows=8, num_cores=2))
    assert jnp.allclose(loss_p, ref_p, rtol=1e-3, atol=1e-6), (loss_p, ref_p)

    # 5) bf16 logits (kernel upcasts to f32 in VMEM)
    logits_bf = logits.astype(jnp.bfloat16)
    ref_bf = _reference(logits_bf, targets, num_labels=C)
    loss_bf = jax.block_until_ready(
        batch_balanced_focal_loss(logits_bf, targets, num_labels=C,
                                  tile_rows=16))
    assert jnp.allclose(loss_bf, ref_bf, rtol=1e-3, atol=1e-5), (loss_bf, ref_bf)

    # 6) "no valid tokens -> 0.0" path (matches the PyTorch early-exit).
    all_ignored = jnp.full((B, S), IGNORE_INDEX, dtype=jnp.int32)
    zero = jax.block_until_ready(
        batch_balanced_focal_loss(logits, all_ignored, num_labels=C,
                                  tile_rows=8))
    assert float(zero) == 0.0, zero

    print("KERNEL_OK")
</pallas_src>

<mosaic_0001>
module attributes {stable_mosaic.version = 11 : i64} {
  func.func @_bbfl_tile_kernel(%arg0: i32, %arg1: i32, %arg2: memref<8x9xf32, #tpu.memory_space<vmem>>, %arg3: memref<8x1xi32, #tpu.memory_space<vmem>>, %arg4: memref<1x1x9xf32, #tpu.memory_space<vmem>>, %arg5: memref<1x1x9xf32, #tpu.memory_space<vmem>>) attributes {dimension_semantics = [#tpu.dimension_semantics<parallel>, #tpu.dimension_semantics<arbitrary>], iteration_bounds = array<i64: 1, 2>, scalar_prefetch = 0 : i64, scratch_operands = 0 : i64, tpu.core_type = #tpu.core_type<tc>, window_params = [{transform_indices = @transform_0, window_bounds = array<i64: 8, 9>}, {transform_indices = @transform_1, window_bounds = array<i64: 8, 1>}, {transform_indices = @transform_2, window_bounds = array<i64: 1, 1, 9>}, {transform_indices = @transform_3, window_bounds = array<i64: 1, 1, 9>}]} {
    %c0_i32 = arith.constant 0 : i32
    %0 = arith.cmpi eq, %arg1, %c0_i32 : i32
    %1 = arith.extui %0 : i1 to i32
    %c0_i32_0 = arith.constant 0 : i32
    %2 = arith.cmpi ne, %1, %c0_i32_0 : i32
    scf.if %2 {
      %cst_25 = arith.constant 0.000000e+00 : f32
      %60 = vector.broadcast %cst_25 : f32 to vector<1x1x9xf32>
      %c0_26 = arith.constant 0 : index
      %c0_27 = arith.constant 0 : index
      %c0_28 = arith.constant 0 : index
      %61 = vector.load %arg4[%c0_26, %c0_27, %c0_28] : memref<1x1x9xf32, #tpu.memory_space<vmem>>, vector<1x1x9xf32>
      tpu.vector_store %arg4[%c0_26, %c0_27, %c0_28], %60 {strides = array<i32>} : memref<1x1x9xf32, #tpu.memory_space<vmem>>, vector<1x1x9xf32>,
      %cst_29 = arith.constant 0.000000e+00 : f32
      %62 = vector.broadcast %cst_29 : f32 to vector<1x1x9xf32>
      %c0_30 = arith.constant 0 : index
      %c0_31 = arith.constant 0 : index
      %c0_32 = arith.constant 0 : index
      %63 = vector.load %arg5[%c0_30, %c0_31, %c0_32] : memref<1x1x9xf32, #tpu.memory_space<vmem>>, vector<1x1x9xf32>
      tpu.vector_store %arg5[%c0_30, %c0_31, %c0_32], %62 {strides = array<i32>} : memref<1x1x9xf32, #tpu.memory_space<vmem>>, vector<1x1x9xf32>,
    } else {
    }
    %c0 = arith.constant 0 : index
    %c0_1 = arith.constant 0 : index
    %3 = vector.load %arg2[%c0, %c0_1] : memref<8x9xf32, #tpu.memory_space<vmem>>, vector<8x9xf32>
    %c0_2 = arith.constant 0 : index
    %c0_3 = arith.constant 0 : index
    %4 = vector.load %arg3[%c0_2, %c0_3] : memref<8x1xi32, #tpu.memory_space<vmem>>, vector<8x1xi32>
    %c2_i32 = arith.constant 2 : i32
    %5 = arith.muli %arg0, %c2_i32 : i32
    %6 = arith.addi %5, %arg1 : i32
    %7 = tpu.iota {dimensions = array<i32: 0>} : vector<8x1xi32>
    %c8_i32 = arith.constant 8 : i32
    %8 = arith.muli %6, %c8_i32 : i32
    %9 = vector.broadcast %8 : i32 to vector<8x1xi32>
    %10 = arith.addi %7, %9 : vector<8x1xi32>
    %c-100_i32 = arith.constant -100 : i32
    %11 = vector.broadcast %c-100_i32 : i32 to vector<8x1xi32>
    %12 = arith.cmpi ne, %4, %11 : vector<8x1xi32>
    %c16_i32 = arith.constant 16 : i32
    %13 = vector.broadcast %c16_i32 : i32 to vector<8x1xi32>
    %14 = arith.cmpi slt, %10, %13 : vector<8x1xi32>
    %15 = arith.andi %12, %14 : vector<8x1xi1>
    %c-1_i32 = arith.constant -1 : i32
    %16 = vector.broadcast %c-1_i32 : i32 to vector<8x1xi32>
    %17 = arith.select %15, %4, %16 : vector<8x1xi1>, vector<8x1xi32>
    %18 = tpu.iota {dimensions = array<i32: 1>} : vector<1x9xi32>
    %19 = vector.broadcast %18 : vector<1x9xi32> to vector<8x9xi32>
    %20 = vector.broadcast %17 : vector<8x1xi32> to vector<8x9xi32>
    %21 = arith.cmpi eq, %19, %20 : vector<8x9xi32>
    %cst = arith.constant 1.000000e+00 : f32
    %cst_4 = arith.constant 0.000000e+00 : f32
    %22 = vector.broadcast %cst : f32 to vector<8x9xf32>
    %23 = vector.broadcast %cst_4 : f32 to vector<8x9xf32>
    %24 = arith.select %21, %22, %23 : vector<8x9xi1>, vector<8x9xf32>
    %cst_5 = arith.constant dense<0xFF800000> : vector<8xf32>
    %25 = vector.multi_reduction <maximumf>, %3, %cst_5 [1] : vector<8x9xf32> to vector<8xf32>
    %26 = vector.shape_cast %25 : vector<8xf32> to vector<8x1xf32>
    %27 = vector.broadcast %26 : vector<8x1xf32> to vector<8x9xf32>
    %28 = arith.subf %3, %27 : vector<8x9xf32>
    %29 = math.exp %28 : vector<8x9xf32>
    %cst_6 = arith.constant dense<0.000000e+00> : vector<8xf32>
    %30 = vector.multi_reduction <add>, %29, %cst_6 [1] : vector<8x9xf32> to vector<8xf32>
    %31 = vector.shape_cast %30 : vector<8xf32> to vector<8x1xf32>
    %32 = arith.mulf %24, %28 : vector<8x9xf32>
    %cst_7 = arith.constant dense<0.000000e+00> : vector<8xf32>
    %33 = vector.multi_reduction <add>, %32, %cst_7 [1] : vector<8x9xf32> to vector<8xf32>
    %34 = vector.shape_cast %33 : vector<8xf32> to vector<8x1xf32>
    %35 = math.log %31 : vector<8x1xf32>
    %36 = arith.subf %35, %34 : vector<8x1xf32>
    %cst_8 = arith.constant 0.000000e+00 : f32
    %37 = vector.broadcast %cst_8 : f32 to vector<8x1xf32>
    %38 = arith.subf %37, %36 : vector<8x1xf32>
    %39 = math.exp %38 : vector<8x1xf32>
    %cst_9 = arith.constant 1.000000e+00 : f32
    %40 = vector.broadcast %cst_9 : f32 to vector<8x1xf32>
    %41 = arith.subf %40, %39 : vector<8x1xf32>
    %42 = arith.mulf %41, %41 : vector<8x1xf32>
    %43 = arith.mulf %42, %36 : vector<8x1xf32>
    %cst_10 = arith.constant 0.000000e+00 : f32
    %44 = vector.broadcast %cst_10 : f32 to vector<8x1xf32>
    %45 = arith.select %15, %43, %44 : vector<8x1xi1>, vector<8x1xf32>
    %c0_11 = arith.constant 0 : index
    %c0_12 = arith.constant 0 : index
    %c0_13 = arith.constant 0 : index
    %46 = vector.load %arg4[%c0_11, %c0_12, %c0_13] : memref<1x1x9xf32, #tpu.memory_space<vmem>>, vector<1x1x9xf32>
    %cst_14 = arith.constant dense<0.000000e+00> : vector<9xf32>
    %47 = vector.multi_reduction <add>, %24, %cst_14 [0] : vector<8x9xf32> to vector<9xf32>
    %48 = vector.shape_cast %47 : vector<9xf32> to vector<1x9xf32>
    %49 = vector.shape_cast %48 : vector<1x9xf32> to vector<1x1x9xf32>
    %50 = arith.addf %46, %49 : vector<1x1x9xf32>
    %c0_15 = arith.constant 0 : index
    %c0_16 = arith.constant 0 : index
    %c0_17 = arith.constant 0 : index
    %51 = vector.load %arg4[%c0_15, %c0_16, %c0_17] : memref<1x1x9xf32, #tpu.memory_space<vmem>>, vector<1x1x9xf32>
    tpu.vector_store %arg4[%c0_15, %c0_16, %c0_17], %50 {strides = array<i32>} : memref<1x1x9xf32, #tpu.memory_space<vmem>>, vector<1x1x9xf32>,
    %c0_18 = arith.constant 0 : index
    %c0_19 = arith.constant 0 : index
    %c0_20 = arith.constant 0 : index
    %52 = vector.load %arg5[%c0_18, %c0_19, %c0_20] : memref<1x1x9xf32, #tpu.memory_space<vmem>>, vector<1x1x9xf32>
    %53 = vector.broadcast %45 : vector<8x1xf32> to vector<8x9xf32>
    %54 = arith.mulf %24, %53 : vector<8x9xf32>
    %cst_21 = arith.constant dense<0.000000e+00> : vector<9xf32>
    %55 = vector.multi_reduction <add>, %54, %cst_21 [0] : vector<8x9xf32> to vector<9xf32>
    %56 = vector.shape_cast %55 : vector<9xf32> to vector<1x9xf32>
    %57 = vector.shape_cast %56 : vector<1x9xf32> to vector<1x1x9xf32>
    %58 = arith.addf %52, %57 : vector<1x1x9xf32>
    %c0_22 = arith.constant 0 : index
    %c0_23 = arith.constant 0 : index
    %c0_24 = arith.constant 0 : index
    %59 = vector.load %arg5[%c0_22, %c0_23, %c0_24] : memref<1x1x9xf32, #tpu.memory_space<vmem>>, vector<1x1x9xf32>
    tpu.vector_store %arg5[%c0_22, %c0_23, %c0_24], %58 {strides = array<i32>} : memref<1x1x9xf32, #tpu.memory_space<vmem>>, vector<1x1x9xf32>,
    return
  }
  func.func @transform_0(%arg0: i32, %arg1: i32) -> (i32, i32) {
    %c2_i32 = arith.constant 2 : i32
    %0 = arith.muli %arg0, %c2_i32 : i32
    %1 = arith.addi %0, %arg1 : i32
    %c1_i32 = arith.constant 1 : i32
    %2 = arith.minsi %1, %c1_i32 : i32
    %c0_i32 = arith.constant 0 : i32
    %c0_i32_0 = arith.constant 0 : i32
    return %2, %c0_i32 : i32, i32
  }
  func.func @transform_1(%arg0: i32, %arg1: i32) -> (i32, i32) {
    %c2_i32 = arith.constant 2 : i32
    %0 = arith.muli %arg0, %c2_i32 : i32
    %1 = arith.addi %0, %arg1 : i32
    %c1_i32 = arith.constant 1 : i32
    %2 = arith.minsi %1, %c1_i32 : i32
    %c0_i32 = arith.constant 0 : i32
    %c0_i32_0 = arith.constant 0 : i32
    return %2, %c0_i32 : i32, i32
  }
  func.func @transform_2(%arg0: i32, %arg1: i32) -> (i32, i32, i32) {
    %c0_i32 = arith.constant 0 : i32
    %c0_i32_0 = arith.constant 0 : i32
    %c0_i32_1 = arith.constant 0 : i32
    return %arg0, %c0_i32, %c0_i32_0 : i32, i32, i32
  }
  func.func @transform_3(%arg0: i32, %arg1: i32) -> (i32, i32, i32) {
    %c0_i32 = arith.constant 0 : i32
    %c0_i32_0 = arith.constant 0 : i32
    %c0_i32_1 = arith.constant 0 : i32
    return %arg0, %c0_i32, %c0_i32_0 : i32, i32, i32
  }
}

</mosaic_0001>

<llo_original>
// kernel: tpu_custom_call.1
$region0: #{tpu_custom_call.1}
  #allocation0 [shape = 'u32[]', space=smem, size = 0x4, offset = 0x4, fixed_abs, tag = 'smem constant byte address 0x4 - core index']
  #allocation1 [shape = 'u32[144,128]{1,0:T(1,128)}', space=vmem, size = 0x12000, scoped, tag = 'internal scratch']
  %s0 = inlined_call_operand.hbm [shape: f32[16,9], index: 0, kind: input, shape index: {}]
  %s1 = inlined_call_operand.hbm [shape: s32[16,1], index: 1, kind: input, shape index: {}]
  %s2 = inlined_call_operand.hbm [shape: f32[1,1,9], index: 2, kind: output, shape index: {0}]
  %s3 = inlined_call_operand.hbm [shape: f32[1,1,9], index: 3, kind: output, shape index: {1}]
  %4 = xla_tuple %s2, %s3
  %s5 = sld [smem:[#allocation0]]
  $region61: #{tpu_custom_call.1} parent=0
    _
  %s7 = ssub.s32 1, %s5
  %s8 = scalar_select 0, %s7, %s5
  $region1: #{tpu_custom_call.1} parent=0
    #allocation2 [shape = 'u8[8192]{0}', space=vmem, size = 0x2000, scoped, tag = 'input window, operand 0']
    #allocation3 [shape = 's32[2]{0}', space=sflag, size = 0x8, scoped, tag = 'scoped memory for tpu_custom_call.1']
    #allocation4 [shape = 's32[2]{0}', space=sflag, size = 0x8, scoped, tag = 'scoped memory for tpu_custom_call.1']
    #allocation5 [shape = 'u8[8192]{0}', space=vmem, size = 0x2000, scoped, tag = 'input window, operand 1']
    #allocation6 [shape = 's32[2]{0}', space=sflag, size = 0x8, scoped, tag = 'scoped memory for tpu_custom_call.1']
    #allocation7 [shape = 'u8[512]{0}', space=vmem, size = 0x400, scoped, tag = 'output window, operand 0, single buffered']
    #allocation8 [shape = 'u8[512]{0}', space=vmem, size = 0x400, scoped, tag = 'output window, operand 1, single buffered']
    #allocation9 [shape = 's32[1]{0}', space=sflag, size = 0x4, scoped, tag = 'scoped memory for tpu_custom_call.1']
    %9 = vsyncpa [#allocation3], 0
    %s10 = scalar_lea.sflag [#allocation3], 1
    %11 = vsyncpa %s10, 0
    %12 = vsyncpa [#allocation6], 0
    %s13 = scalar_lea.sflag [#allocation6], 1
    %14 = vsyncpa %s13, 0
    %15 = vsyncpa [#allocation4], 0
    %16 = vsyncpa [#allocation9], 0
    loop: start=0, step=1, limit=4
    $region2: #{tpu_custom_call.1} parent=1 // loop_pre_header
      _
    $region3: #{tpu_custom_call.1} parent=1 // loop_header
      %s18 = sphi 0, %s22
      %p19 = scmp.ge.s32.totalorder %s18, 4
      %s25 = sphi 0, %s37
      %s26 = sphi 0, %s33
      %s27 = sphi 0, %s25
      %s28 = sphi 0, %s26
      %s29 = sphi 0, %s27
      %s30 = sphi 0, %s28
      %s48 = sphi 0, %s50
      %s51 = sphi 0, %s48
      %s52 = sphi 0, %s51
      %s68 = sphi 0, %s52
      %s82 = sphi 0, %s84
      %s85 = sphi 0, %s82
      %s86 = sphi 0, %s85
      %s102 = sphi 0, %s86
      %s108 = sphi 0, %s110
      %s111 = sphi 0, %s108
      %s112 = sphi 0, %s111
      %s128 = sphi 0, %s112
      %s134 = sphi 0, %s136
      %s137 = sphi 0, %s134
      %s138 = sphi 0, %s137
      %s154 = sphi 0, %s138
    $region4: #{tpu_custom_call.1} parent=1 // loop_header_branch
      %21 = sbr.rel (%p19) target = $region8
    $region5: #{tpu_custom_call.1} parent=1 // loop_body
      %s23 = ssub.s32 %s18, 1
      %s24 = ssub.s32 %s18, 2
      %s31 = sadd.s32 1, %s26
      %p32 = scmp.ge.s32.totalorder %s31, 2
      %s33 = scalar_select %p32, 0, %s31
      %s34 = sadd.s32 1, %s25
      %s35 = scalar_select %p32, %s34, %s25
      %p36 = scmp.ge.s32.totalorder %s35, 1
      %s37 = scalar_select %p36, 0, %s35
      %s38 = smul.u32 %s25, 2
      %s39 = sadd.s32 %s38, %s26
      %p40 = scmp.lt.s32.totalorder %s39, 1
      %s41 = scalar_select %p40, %s39, 1
      %s42 = smul.u32 %s37, 2
      %s43 = sadd.s32 %s42, %s33
      %p44 = scmp.lt.s32.totalorder %s43, 1
      %s45 = scalar_select %p44, %s43, 1
      %s46 = ssub.s32 %s41, %s45
      %p47 = scmp.eq.s32.totalorder %s46, 0
      %s49 = sadd.s32 %s48, 1
      %s50 = scalar_select %p47, %s48, %s49
      %p53 = pneg %p47
      %p54 = scmp.eq.s32.totalorder %s18, 1
      %p55 = por %p53, %p54
      %p56 = scmp.ne.s32.totalorder %s48, %s51
      %p57 = scmp.eq.s32.totalorder %s18, 0
      %p58 = por %p56, %p57
      %p59 = scmp.ne.s32.totalorder %s48, %s51
      %p60 = scmp.eq.s32.totalorder %s23, 1
      %p61 = por %p59, %p60
      %p62 = scmp.ne.s32.totalorder %s51, %s52
      %p63 = scmp.eq.s32.totalorder %s23, 0
      %p64 = por %p62, %p63
      %p65 = scmp.ne.s32.totalorder %s51, %s52
      %p66 = scmp.eq.s32.totalorder %s24, 1
      %p67 = por %p65, %p66
      %p69 = scmp.ne.s32.totalorder %s52, %s68
      %p70 = scmp.eq.s32.totalorder %s24, 0
      %p71 = por %p69, %p70
      %s72 = smul.u32 %s25, 2
      %s73 = sadd.s32 %s72, %s26
      %p74 = scmp.lt.s32.totalorder %s73, 1
      %s75 = scalar_select %p74, %s73, 1
      %s76 = smul.u32 %s37, 2
      %s77 = sadd.s32 %s76, %s33
      %p78 = scmp.lt.s32.totalorder %s77, 1
      %s79 = scalar_select %p78, %s77, 1
      %s80 = ssub.s32 %s75, %s79
      %p81 = scmp.eq.s32.totalorder %s80, 0
      %s83 = sadd.s32 %s82, 1
      %s84 = scalar_select %p81, %s82, %s83
      %p87 = pneg %p81
      %p88 = scmp.eq.s32.totalorder %s18, 1
      %p89 = por %p87, %p88
      %p90 = scmp.ne.s32.totalorder %s82, %s85
      %p91 = scmp.eq.s32.totalorder %s18, 0
      %p92 = por %p90, %p91
      %p93 = scmp.ne.s32.totalorder %s82, %s85
      %p94 = scmp.eq.s32.totalorder %s23, 1
      %p95 = por %p93, %p94
      %p96 = scmp.ne.s32.totalorder %s85, %s86
      %p97 = scmp.eq.s32.totalorder %s23, 0
      %p98 = por %p96, %p97
      %p99 = scmp.ne.s32.totalorder %s85, %s86
      %p100 = scmp.eq.s32.totalorder %s24, 1
      %p101 = por %p99, %p100
      %p103 = scmp.ne.s32.totalorder %s86, %s102
      %p104 = scmp.eq.s32.totalorder %s24, 0
      %p105 = por %p103, %p104
      %s106 = ssub.s32 %s25, %s37
      %p107 = scmp.eq.s32.totalorder %s106, 0
      %s109 = sadd.s32 %s108, 1
      %s110 = scalar_select %p107, %s108, %s109
      %p113 = pneg %p107
      %p114 = scmp.eq.s32.totalorder %s18, 1
      %p115 = por %p113, %p114
      %p116 = scmp.ne.s32.totalorder %s108, %s111
      %p117 = scmp.eq.s32.totalorder %s18, 0
      %p118 = por %p116, %p117
      %p119 = scmp.ne.s32.totalorder %s108, %s111
      %p120 = scmp.eq.s32.totalorder %s23, 1
      %p121 = por %p119, %p120
      %p122 = scmp.ne.s32.totalorder %s111, %s112
      %p123 = scmp.eq.s32.totalorder %s23, 0
      %p124 = por %p122, %p123
      %p125 = scmp.ne.s32.totalorder %s111, %s112
      %p126 = scmp.eq.s32.totalorder %s24, 1
      %p127 = por %p125, %p126
      %p129 = scmp.ne.s32.totalorder %s112, %s128
      %p130 = scmp.eq.s32.totalorder %s24, 0
      %p131 = por %p129, %p130
      %s132 = ssub.s32 %s25, %s37
      %p133 = scmp.eq.s32.totalorder %s132, 0
      %s135 = sadd.s32 %s134, 1
      %s136 = scalar_select %p133, %s134, %s135
      %p139 = pneg %p133
      %p140 = scmp.eq.s32.totalorder %s18, 1
      %p141 = por %p139, %p140
      %p142 = scmp.ne.s32.totalorder %s134, %s137
      %p143 = scmp.eq.s32.totalorder %s18, 0
      %p144 = por %p142, %p143
      %p145 = scmp.ne.s32.totalorder %s134, %s137
      %p146 = scmp.eq.s32.totalorder %s23, 1
      %p147 = por %p145, %p146
      %p148 = scmp.ne.s32.totalorder %s137, %s138
      %p149 = scmp.eq.s32.totalorder %s23, 0
      %p150 = por %p148, %p149
      %p151 = scmp.ne.s32.totalorder %s137, %s138
      %p152 = scmp.eq.s32.totalorder %s24, 1
      %p153 = por %p151, %p152
      %p155 = scmp.ne.s32.totalorder %s138, %s154
      %p156 = scmp.eq.s32.totalorder %s24, 0
      %p157 = por %p155, %p156
      %p158 = scmp.le.s32.totalorder 1, %s18
      %p159 = scmp.lt.s32.totalorder %s18, 3
      %p160 = pnand %p158, %p159
      %p161 = pneg %p160
      // Predicated region
      $region9: #{tpu_custom_call.1} parent=5 // pred_check
        _
      $region10: #{tpu_custom_call.1} parent=5 // pred_check_branch
        %163 = sbr.rel (%p160) target = $region12
      $region11: #{tpu_custom_call.1} parent=5 // pred_region
        %s164 = ssub.s32 %s18, 1
      $region12: #{tpu_custom_call.1} parent=5 // pred_fallthru
        _
      %p165 = scmp.lt.s32.totalorder %s18, 2
      // Predicated region
      $region13: #{tpu_custom_call.1} parent=5 // pred_check
        %p166 = pneg %p165
      $region14: #{tpu_custom_call.1} parent=5 // pred_check_branch
        %168 = sbr.rel (%p166) target = $region16
      $region15: #{tpu_custom_call.1} parent=5 // pred_region
        // Predicated region
        $region17: #{tpu_custom_call.1} parent=15 // pred_check
          %p169 = pneg %p58
        $region18: #{tpu_custom_call.1} parent=15 // pred_check_branch
          %171 = sbr.rel (%p169) target = $region20
        $region19: #{tpu_custom_call.1} parent=15 // pred_region
          %s172 = sand.u32 %s48, 1
          %s173 = scalar_lea.sflag [#allocation3], %s172
          %s174 = sand.u32 %s48, 1
          %s175 = smul.addr %s174, 8
          %s176 = scalar_lea.vmem [#allocation2], %s175
          %s177 = smul.u32 %s25, 2
          %s178 = sadd.s32 %s177, %s26
          %p179 = scmp.lt.s32.totalorder %s178, 1
          %s180 = scalar_select %p179, %s178, 1
          %s182 = ssub.s32 128, 128
          %183 = vsyncadd %s173, %s182
          %s184 = smul.addr %s180, 128
          %s185 = scalar_lea.hbm %s0, %s184
          %s187 = sshll.u32 %s176, 4
          %s188 = int_to_ptr.vmem [resolvable:$true] %s187
          %190 = dma.hbm_to_vmem [thread:$0]  %s185, 128, %s188, %s173
        $region20: #{tpu_custom_call.1} parent=15 // pred_fallthru
          _
        // Predicated region
        $region21: #{tpu_custom_call.1} parent=15 // pred_check
          %p191 = pneg %p92
        $region22: #{tpu_custom_call.1} parent=15 // pred_check_branch
          %193 = sbr.rel (%p191) target = $region24
        $region23: #{tpu_custom_call.1} parent=15 // pred_region
          %s194 = sand.u32 %s82, 1
          %s195 = scalar_lea.sflag [#allocation6], %s194
          %s196 = sand.u32 %s82, 1
          %s197 = smul.addr %s196, 8
          %s198 = scalar_lea.vmem [#allocation5], %s197
          %s199 = smul.u32 %s25, 2
          %s200 = sadd.s32 %s199, %s26
          %p201 = scmp.lt.s32.totalorder %s200, 1
          %s202 = scalar_select %p201, %s200, 1
          %s204 = ssub.s32 128, 128
          %205 = vsyncadd %s195, %s204
          %s206 = smul.addr %s202, 128
          %s207 = scalar_lea.hbm %s1, %s206
          %s209 = sshll.u32 %s198, 4
          %s210 = int_to_ptr.vmem [resolvable:$true] %s209
          %212 = dma.hbm_to_vmem [thread:$0]  %s207, 128, %s210, %s195
        $region24: #{tpu_custom_call.1} parent=15 // pred_fallthru
          _
      $region16: #{tpu_custom_call.1} parent=5 // pred_fallthru
        _
      %p213 = scmp.le.s32.totalorder 1, %s18
      %p214 = scmp.lt.s32.totalorder %s18, 3
      %p215 = pnand %p213, %p214
      %p216 = pneg %p215
      // Predicated region
      $region25: #{tpu_custom_call.1} parent=5 // pred_check
        _
      $region26: #{tpu_custom_call.1} parent=5 // pred_check_branch
        %218 = sbr.rel (%p215) target = $region28
      $region27: #{tpu_custom_call.1} parent=5 // pred_region
        %s219 = ssub.s32 %s18, 1
        %s220 = sand.u32 %s51, 1
        %s221 = scalar_lea.sflag [#allocation3], %s220
        %s222 = sand.u32 %s51, 1
        %s223 = smul.addr %s222, 8
        %s224 = scalar_lea.vmem [#allocation2], %s223
        // Predicated region
        $region29: #{tpu_custom_call.1} parent=27 // pred_check
          %p225 = pneg %p64
        $region30: #{tpu_custom_call.1} parent=27 // pred_check_branch
          %227 = sbr.rel (%p225) target = $region32
        $region31: #{tpu_custom_call.1} parent=27 // pred_region
          %228 = dma.done %s221, 128
        $region32: #{tpu_custom_call.1} parent=27 // pred_fallthru
          _
        %s229 = sand.u32 %s85, 1
        %s230 = scalar_lea.sflag [#allocation6], %s229
        %s231 = sand.u32 %s85, 1
        %s232 = smul.addr %s231, 8
        %s233 = scalar_lea.vmem [#allocation5], %s232
        // Predicated region
        $region33: #{tpu_custom_call.1} parent=27 // pred_check
          %p234 = pneg %p98
        $region34: #{tpu_custom_call.1} parent=27 // pred_check_branch
          %236 = sbr.rel (%p234) target = $region36
        $region35: #{tpu_custom_call.1} parent=27 // pred_region
          %237 = dma.done %s230, 128
        $region36: #{tpu_custom_call.1} parent=27 // pred_fallthru
          _
        %s238 = sand.u32 %s51, 1
        %s239 = scalar_lea.sflag [#allocation3], %s238
        %s240 = sand.u32 %s51, 1
        %s241 = smul.addr %s240, 8
        %s242 = scalar_lea.vmem [#allocation2], %s241
        %p243 = pneg %p64
        %p244 = pneg %p61
        %s245 = sand.u32 %s85, 1
        %s246 = scalar_lea.sflag [#allocation6], %s245
        %s247 = sand.u32 %s85, 1
        %s248 = smul.addr %s247, 8
        %s249 = scalar_lea.vmem [#allocation5], %s248
        %p250 = pneg %p98
        %p251 = pneg %p95
        %p252 = pneg %p124
        %p253 = pneg %p121
        %p254 = pneg %p150
        %p255 = pneg %p147
        %s256 = smul.u32 %s27, 2
        %s257 = sadd.s32 %s256, %s28
        %p258 = scmp.lt.s32.totalorder %s257, 1
        %s259 = scalar_select %p258, %s257, 1
        %s260 = smul.u32 %s27, 2
        %s261 = sadd.s32 %s260, %s28
        %p262 = scmp.lt.s32.totalorder %s261, 1
        %s263 = scalar_select %p262, %s261, 1
        %p264 = scmp.eq.s32.totalorder %s28, 0
        // Predicated region
        $region37: #{tpu_custom_call.1} parent=27 // pred_check
          %p265 = pneg %p264
        $region38: #{tpu_custom_call.1} parent=27 // pred_check_branch
          %267 = sbr.rel (%p265) target = $region40
        $region39: #{tpu_custom_call.1} parent=27 // pred_region
          %vm268 = vcmask 65536
          %269 = vst.msk [vmem:[#allocation7] sm:$0x1] %vm268, 0.0
          %270 = vst.msk [vmem:[#allocation8] sm:$0x1] %vm268, 0.0
        $region40: #{tpu_custom_call.1} parent=27 // pred_fallthru
          _
        %v271 = vld [vmem:[%s224] sm:$0xff]
        %v272 = vld [vmem:[%s233] sm:$0xff]
        %s273 = smul.u32 %s27, 2
        %s274 = sadd.s32 %s273, %s28
        %v275 = vlaneseq
        %v276 = vshrl.u32 %v275, 7
        %s277 = smul.u32 %s274, 8
        %v278 = vstv %s277
        %v279 = vadd.s32 %v276, %v278
        %vm280 = vcmp.ne.s32.totalorder %v272, 4294967196
        %vm281 = vcmp.lt.s32.totalorder %v279, 16
        %vm282 = vmand %vm280, %vm281
        %v283 = vsel %vm282, %v272, 4294967295
        %v284 = vlaneseq
        %v285 = vand.u32 %v284, 127
        %286 = vset.pattern.permute.xlu0 0
        %287 = vperm.xlu0 %286, %v283
        %v288 = vpop.permute.xlu0 %287
        %vm289 = vcmp.eq.s32.totalorder %v285, %v288
        %v290 = vsel %vm289, 1.0, 0.0
        %vm291 = vcmask 72704
        %v292 = vsel %vm291, %v271, -inf
        %293 = vmax.xlane.f32.xlu0 %v292
        %v294 = vpop.xlane.xlu0 %293
        %v295 = vsub.f32 %v271, %v294
        %v296 = vmul.f32 %v295, 1.442695
        %v297 = vpow.pop %v296
        %v298 = vsel %vm291, %v297, 0.0
        %299 = vadd.xlane.f32.xlu0 %v298
        %v300 = vpop.xlane.xlu0 %299
        %v301 = vmul.f32 %v290, %v295
        %v302 = vsel %vm291, %v301, 0.0
        %303 = vadd.xlane.f32.xlu0 %v302
        %v304 = vpop.xlane.xlu0 %303
        %v305 = vlog2.pop %v300
        %v306 = vmul.f32 %v305, 0.6931472
        %v307 = vsub.f32 %v306, %v304
        %v308 = vsub.f32 0.0, %v307
        %v309 = vmul.f32 %v308, 1.442695
        %v310 = vpow.pop %v309
        %v311 = vsub.f32 1.0, %v310
        %v312 = vmul.f32 %v311, %v311
        %v313 = vmul.f32 %v312, %v307
        %v314 = vsel %vm282, %v313, 0.0
        %v315 = vld [vmem:[#allocation7] sm:$0x1]
        %v316 = vsel %vm291, %v290, 0.0
        %v317 = vrot.slane %v316, 4
        %v318 = vadd.f32 %v316, %v317
        %v319 = vrot.slane %v318, 2
        %v320 = vadd.f32 %v318, %v319
        %v321 = vrot.slane %v320, 1
        %v322 = vadd.f32 %v320, %v321
        %v323 = vadd.f32 %v315, %v322
        %vm324 = vcmask 65536
        %325 = vst.msk [vmem:[#allocation7] sm:$0x1] %vm324, %v323
        %v326 = vld [vmem:[#allocation8] sm:$0x1]
        %328 = vset.pattern.permute.xlu0 0
        %329 = vperm.xlu0 %328, %v314
        %v330 = vpop.permute.xlu0 %329
        %v332 = vmul.f32 %v290, %v330
        %v333 = vsel %vm291, %v332, 0.0
        %v334 = vrot.slane %v333, 4
        %v335 = vadd.f32 %v333, %v334
        %v336 = vrot.slane %v335, 2
        %v337 = vadd.f32 %v335, %v336
        %v338 = vrot.slane %v337, 1
        %v339 = vadd.f32 %v337, %v338
        %v340 = vadd.f32 %v326, %v339
        %341 = vst.msk [vmem:[#allocation8] sm:$0x1] %vm324, %v340
        // Predicated region
        $region41: #{tpu_custom_call.1} parent=27 // pred_check
          %p342 = pneg %p121
        $region42: #{tpu_custom_call.1} parent=27 // pred_check_branch
          %344 = sbr.rel (%p342) target = $region44
        $region43: #{tpu_custom_call.1} parent=27 // pred_region
          %s346 = ssub.s32 16, 16
          %347 = vsyncadd [#allocation4], %s346
          %s348 = smul.addr %s27, 16
          %s349 = scalar_lea.hbm %s2, %s348
          %s351 = sshll.u32 [#allocation7], 4
          %s352 = int_to_ptr.vmem [resolvable:$true] %s351
          %354 = dma.vmem_to_hbm [thread:$0]  %s352, 16, %s349, [#allocation4]
        $region44: #{tpu_custom_call.1} parent=27 // pred_fallthru
          _
        // Predicated region
        $region45: #{tpu_custom_call.1} parent=27 // pred_check
          %p355 = pneg %p147
        $region46: #{tpu_custom_call.1} parent=27 // pred_check_branch
          %357 = sbr.rel (%p355) target = $region48
        $region47: #{tpu_custom_call.1} parent=27 // pred_region
          %s359 = ssub.s32 16, 16
          %360 = vsyncadd [#allocation9], %s359
          %s361 = smul.addr %s27, 16
          %s362 = scalar_lea.hbm %s3, %s361
          %s364 = sshll.u32 [#allocation8], 4
          %s365 = int_to_ptr.vmem [resolvable:$true] %s364
          %367 = dma.vmem_to_hbm [thread:$0]  %s365, 16, %s362, [#allocation9]
        $region48: #{tpu_custom_call.1} parent=27 // pred_fallthru
          _
        // Predicated region
        $region49: #{tpu_custom_call.1} parent=27 // pred_check
          %p368 = pneg %p121
        $region50: #{tpu_custom_call.1} parent=27 // pred_check_branch
          %370 = sbr.rel (%p368) target = $region52
        $region51: #{tpu_custom_call.1} parent=27 // pred_region
          %371 = dma.done [#allocation4], 16
        $region52: #{tpu_custom_call.1} parent=27 // pred_fallthru
          _
        // Predicated region
        $region53: #{tpu_custom_call.1} parent=27 // pred_check
          %p372 = pneg %p147
        $region54: #{tpu_custom_call.1} parent=27 // pred_check_branch
          %374 = sbr.rel (%p372) target = $region56
        $region55: #{tpu_custom_call.1} parent=27 // pred_region
          %375 = dma.done [#allocation9], 16
        $region56: #{tpu_custom_call.1} parent=27 // pred_fallthru
          _
      $region28: #{tpu_custom_call.1} parent=5 // pred_fallthru
        _
      %p376 = scmp.le.s32.totalorder 2, %s18
      // Predicated region
      $region57: #{tpu_custom_call.1} parent=5 // pred_check
        %p377 = pneg %p376
      $region58: #{tpu_custom_call.1} parent=5 // pred_check_branch
        %379 = sbr.rel (%p377) target = $region60
      $region59: #{tpu_custom_call.1} parent=5 // pred_region
        %s380 = ssub.s32 %s18, 2
      $region60: #{tpu_custom_call.1} parent=5 // pred_fallthru
        _
    $region6: #{tpu_custom_call.1} parent=1 // loop_footer
      %s22 = sadd.s32 1, %s18
    $region7: #{tpu_custom_call.1} parent=1 // loop_footer_branch
      %17 = sbr.rel target = $region3
    $region8: #{tpu_custom_call.1} parent=1 // loop_exit
      _
    %381 = vsyncpa [#allocation3], 1
    %s382 = scalar_lea.sflag [#allocation3], 1
    %383 = vsyncpa %s382, 1
    %384 = vsyncpa [#allocation6], 1
    %s385 = scalar_lea.sflag [#allocation6], 1
    %386 = vsyncpa %s385, 1
    %387 = vsyncpa [#allocation4], 1
    %s388 = scalar_lea.sflag [#allocation4], 1
    %389 = vsyncpa %s388, 1
    %390 = vsyncpa [#allocation9], 1

</llo_original>
